<compile_context>
chip_gen: v5e
topology: v5e:2x2
jax: 0.10.0
libtpu: 0.0.40
codegen_flags: <defaults>
</compile_context>

<pallas_src>
import functools

import jax
import jax.numpy as jnp
from jax.experimental import pallas as pl
from jax.experimental.pallas import tpu as pltpu


def _round_up(n, m):
    return ((n + m - 1) // m) * m


def _moving_avg_kernel(x_ref, o_ref, *, kernel_size, pad, seq_len, l_out):
    """x_ref: [tB, L] input tile; o_ref: [tB, l_out] stride-1 moving-average tile."""
    tb = x_ref.shape[0]
    lp = seq_len + 2 * pad

    # Single aligned full-tile load, cast to f32 once (matters for bf16 input).
    xf = x_ref[...].astype(jnp.float32)

    # Edge-replication padded sequence built as a value (no scratch stores).
    if pad > 0:
        left = jnp.broadcast_to(xf[:, :1], (tb, pad))
        right = jnp.broadcast_to(xf[:, -1:], (tb, pad))
        xp = jnp.concatenate([left, xf, right], axis=1)
    else:
        xp = xf

    def shift_left(a, m):
        # a[:, o + m] for o < lp - m; the wrapped tail is garbage, never read.
        if m == 0:
            return a
        return jnp.concatenate([a[:, m:], a[:, :m]], axis=1)

    if kernel_size <= 8:
        # Plain unrolled window sum: K unit-stride slices of the padded value.
        acc = xp[:, 0:l_out]
        for k in range(1, kernel_size):
            acc = acc + xp[:, k:k + l_out]
    else:
        # Log-step doubling: S_{2w}[o] = S_w[o] + S_w[o + w]; then combine the
        # binary decomposition of kernel_size. Garbage only ever lands in the
        # tail region o > lp - K, which is never stored.
        pow_sums = {1: xp}
        w = 1
        while 2 * w <= kernel_size:
            s = pow_sums[w]
            pow_sums[2 * w] = s + shift_left(s, w)
            w *= 2
        acc_full = None
        offset = 0
        remaining = kernel_size
        width = w
        while remaining > 0:
            if remaining >= width:
                term = shift_left(pow_sums[width], offset)
                acc_full = term if acc_full is None else acc_full + term
                offset += width
                remaining -= width
            width //= 2
        acc = acc_full[:, 0:l_out]

    o_ref[...] = (acc * (1.0 / kernel_size)).astype(o_ref.dtype)


def moving_avg(x, kernel_size, stride):
    """JAX/Pallas equivalent of MovingAvg.forward for 2-D input x: [B, L]."""
    B, L = x.shape
    pad = (kernel_size - 1) // 2
    Lp = L + 2 * pad
    L_s = Lp - kernel_size + 1                      # stride-1 output length
    assert L_s >= 1, "kernel_size too large for sequence length"
    assert stride >= 1

    itemsize = jnp.dtype(x.dtype).itemsize

    # Chip-aware VMEM budget: ~40 MiB on 64-MiB parts (v7x), ~96 MiB on
    # 128-MiB parts (v5e / v6e).
    try:
        vmem_cap = pltpu.get_tpu_info().vmem_capacity_bytes
    except Exception:
        vmem_cap = 64 << 20
    vmem_budget = (40 << 20) if vmem_cap <= (64 << 20) else (96 << 20)

    # Per-row VMEM bytes: double-buffered in/out blocks + f32 working values
    # (padded sequence, accumulator, shifted temporaries; generous factor 8).
    per_row = 2 * L * itemsize + 2 * L_s * itemsize + 8 * Lp * 4

    # Batch tile: ~2 MiB input blocks, bounded by half the VMEM budget and B.
    tB_bw = max(8, ((2 << 20) // max(1, L * itemsize)) // 8 * 8)
    tB_vmem = max(8, ((vmem_budget // 2) // per_row) // 8 * 8)
    tB = int(min(tB_bw, tB_vmem, _round_up(B, 8)))

    # Keep >= 2 grid steps when the batch allows, so ("parallel",) semantics
    # can shard tiles across both TensorCores on v7x.
    if B > 8 and pl.cdiv(B, tB) < 2:
        tB = _round_up(pl.cdiv(B, 2), 8)

    grid = (pl.cdiv(B, tB),)
    footprint = tB * per_row
    vmem_limit = int(min(max(2 * footprint, 16 << 20), vmem_budget))

    kernel = functools.partial(
        _moving_avg_kernel,
        kernel_size=kernel_size, pad=pad, seq_len=L, l_out=L_s,
    )

    y = pl.pallas_call(
        kernel,
        out_shape=jax.ShapeDtypeStruct((B, L_s), x.dtype),
        grid=grid,
        in_specs=[pl.BlockSpec((tB, L), lambda i: (i, 0))],
        out_specs=pl.BlockSpec((tB, L_s), lambda i: (i, 0)),
        compiler_params=pltpu.CompilerParams(
            dimension_semantics=("parallel",),
            vmem_limit_bytes=vmem_limit,
        ),
    )(x)

    if stride > 1:
        # TODO(synk): lane-dim compaction (strided slice / gather on the lane
        # axis) is not reliably lowered by Mosaic, so stride > 1 is decimated
        # here; the canonical NLinearLHF configuration (stride = 1) is fully
        # fused with no extra HBM pass.
        y = y[:, ::stride]
    return y


def _reference(x, kernel_size, stride):
    """Pure-JAX reference mirroring the torch module (replicate pad + AvgPool1d)."""
    pad = (kernel_size - 1) // 2
    if pad > 0:
        front = jnp.repeat(x[:, :1], pad, axis=1)
        end = jnp.repeat(x[:, -1:], pad, axis=1)
        xp = jnp.concatenate([front, x, end], axis=1)
    else:
        xp = x
    Lp = xp.shape[1]
    L_out = (Lp - kernel_size) // stride + 1
    cols = [jnp.mean(xp[:, o * stride: o * stride + kernel_size], axis=1)
            for o in range(L_out)]
    return jnp.stack(cols, axis=1)


if __name__ == "__main__":
    key = jax.random.PRNGKey(0)

    # MovingAvg has no learnable parameters (AvgPool1d is parameter-free).
    # Canonical NLinearLHF usage: odd kernel, stride 1 (fully fused path).
    B, L = 4, 16
    x = jax.random.normal(key, (B, L), dtype=jnp.float32)
    y = jax.block_until_ready(moving_avg(x, 5, 1))
    y_ref = _reference(x, 5, 1)
    assert y.shape == y_ref.shape, (y.shape, y_ref.shape)
    assert jnp.max(jnp.abs(y - y_ref)) < 1e-5

    # stride > 1 configuration (wrapper-side decimation of the fused result).
    y2 = jax.block_until_ready(moving_avg(x, 5, 2))
    y2_ref = _reference(x, 5, 2)
    assert y2.shape == y2_ref.shape, (y2.shape, y2_ref.shape)
    assert jnp.max(jnp.abs(y2 - y2_ref)) < 1e-5

    # Large kernel (exercises the log-step doubling path) + ragged batch tile.
    B2, L2 = 12, 48
    x2 = jax.random.normal(jax.random.PRNGKey(0), (B2, L2), dtype=jnp.float32)
    y3 = jax.block_until_ready(moving_avg(x2, 25, 1))
    y3_ref = _reference(x2, 25, 1)
    assert y3.shape == y3_ref.shape, (y3.shape, y3_ref.shape)
    assert jnp.max(jnp.abs(y3 - y3_ref)) < 1e-5

    print("KERNEL_OK")
</pallas_src>

<mosaic_0001>
module attributes {stable_mosaic.version = 11 : i64} {
  func.func @_moving_avg_kernel(%arg0: i32, %arg1: memref<8x16xf32, #tpu.memory_space<vmem>>, %arg2: memref<8x16xf32, #tpu.memory_space<vmem>>) attributes {dimension_semantics = [#tpu.dimension_semantics<parallel>], iteration_bounds = array<i64: 1>, scalar_prefetch = 0 : i64, scratch_operands = 0 : i64, tpu.core_type = #tpu.core_type<tc>, window_params = [{transform_indices = @transform_0, window_bounds = array<i64: 8, 16>}, {transform_indices = @transform_1, window_bounds = array<i64: 8, 16>}]} {
    %c0 = arith.constant 0 : index
    %c0_0 = arith.constant 0 : index
    %0 = vector.load %arg1[%c0, %c0_0] : memref<8x16xf32, #tpu.memory_space<vmem>>, vector<8x16xf32>
    %1 = vector.extract_strided_slice %0 {offsets = [0, 0], sizes = [8, 1], strides = [1, 1]} : vector<8x16xf32> to vector<8x1xf32>
    %2 = vector.shape_cast %1 : vector<8x1xf32> to vector<8x1xf32>
    %3 = vector.broadcast %2 : vector<8x1xf32> to vector<8x2xf32>
    %4 = vector.extract_strided_slice %0 {offsets = [0, 15], sizes = [8, 1], strides = [1, 1]} : vector<8x16xf32> to vector<8x1xf32>
    %5 = vector.shape_cast %4 : vector<8x1xf32> to vector<8x1xf32>
    %6 = vector.broadcast %5 : vector<8x1xf32> to vector<8x2xf32>
    %7 = tpu.concatenate %3, %0, %6 in 1 : vector<8x2xf32>, vector<8x16xf32>, vector<8x2xf32> -> vector<8x20xf32>
    %8 = vector.extract_strided_slice %7 {offsets = [0, 0], sizes = [8, 16], strides = [1, 1]} : vector<8x20xf32> to vector<8x16xf32>
    %9 = vector.extract_strided_slice %7 {offsets = [0, 1], sizes = [8, 16], strides = [1, 1]} : vector<8x20xf32> to vector<8x16xf32>
    %10 = arith.addf %8, %9 : vector<8x16xf32>
    %11 = vector.extract_strided_slice %7 {offsets = [0, 2], sizes = [8, 16], strides = [1, 1]} : vector<8x20xf32> to vector<8x16xf32>
    %12 = arith.addf %10, %11 : vector<8x16xf32>
    %13 = vector.extract_strided_slice %7 {offsets = [0, 3], sizes = [8, 16], strides = [1, 1]} : vector<8x20xf32> to vector<8x16xf32>
    %14 = arith.addf %12, %13 : vector<8x16xf32>
    %15 = vector.extract_strided_slice %7 {offsets = [0, 4], sizes = [8, 16], strides = [1, 1]} : vector<8x20xf32> to vector<8x16xf32>
    %16 = arith.addf %14, %15 : vector<8x16xf32>
    %cst = arith.constant 2.000000e-01 : f32
    %17 = vector.broadcast %cst : f32 to vector<8x16xf32>
    %18 = arith.mulf %16, %17 : vector<8x16xf32>
    %c0_1 = arith.constant 0 : index
    %c0_2 = arith.constant 0 : index
    %19 = vector.load %arg2[%c0_1, %c0_2] : memref<8x16xf32, #tpu.memory_space<vmem>>, vector<8x16xf32>
    tpu.vector_store %arg2[%c0_1, %c0_2], %18 {strides = array<i32>} : memref<8x16xf32, #tpu.memory_space<vmem>>, vector<8x16xf32>,
    return
  }
  func.func @transform_0(%arg0: i32) -> (i32, i32) {
    %c0_i32 = arith.constant 0 : i32
    %c0_i32_0 = arith.constant 0 : i32
    return %arg0, %c0_i32 : i32, i32
  }
  func.func @transform_1(%arg0: i32) -> (i32, i32) {
    %c0_i32 = arith.constant 0 : i32
    %c0_i32_0 = arith.constant 0 : i32
    return %arg0, %c0_i32 : i32, i32
  }
}

</mosaic_0001>

<llo_original>
// kernel: tpu_custom_call.1
$region0: #{tpu_custom_call.1}
  #allocation0 [shape = 'u32[]', space=smem, size = 0x4, offset = 0x4, fixed_abs, tag = 'smem constant byte address 0x4 - core index']
  #allocation1 [shape = 'u32[72,128]{1,0:T(1,128)}', space=vmem, size = 0x9000, scoped, tag = 'internal scratch']
  %s0 = inlined_call_operand.hbm [shape: f32[4,16], index: 0, kind: input, shape index: {}]
  %s1 = inlined_call_operand.hbm [shape: f32[4,16], index: 1, kind: output, shape index: {}]
  %s2 = sld [smem:[#allocation0]]
  $region18: #{tpu_custom_call.1} parent=0
    _
  %s4 = ssub.s32 1, %s2
  %s5 = scalar_select 0, %s4, %s2
  $region1: #{tpu_custom_call.1} parent=0
    #allocation2 [shape = 'u8[4096]{0}', space=vmem, size = 0x1000, scoped, tag = 'input window, operand 0, single buffered']
    #allocation3 [shape = 's32[1]{0}', space=sflag, size = 0x4, scoped, tag = 'scoped memory for tpu_custom_call.1']
    #allocation4 [shape = 's32[1]{0}', space=sflag, size = 0x4, scoped, tag = 'scoped memory for tpu_custom_call.1']
    #allocation5 [shape = 'u8[4096]{0}', space=vmem, size = 0x1000, scoped, tag = 'output window, operand 0, single buffered']
    %6 = vsyncpa [#allocation3], 0
    %7 = vsyncpa [#allocation4], 0
    // Predicated region
    $region2: #{tpu_custom_call.1} parent=1 // pred_check
      _
    $region3: #{tpu_custom_call.1} parent=1 // pred_check_branch
      %9 = sbr.rel (0) target = $region5
    $region4: #{tpu_custom_call.1} parent=1 // pred_region
      %11 = vsyncadd [#allocation3], 64
      %s12 = sshll.u32 %s0, 4
      %s13 = int_to_ptr.hbm [resolvable:$true] %s12
      %s14 = sshll.u32 [#allocation2], 4
      %s15 = int_to_ptr.vmem [resolvable:$true] %s14
      %20 = dma.hbm_to_vmem [thread:$0]  %s13, 64, %s15, [#allocation3], 64, 64, 4
    $region5: #{tpu_custom_call.1} parent=1 // pred_fallthru
      _
    // Predicated region
    $region6: #{tpu_custom_call.1} parent=1 // pred_check
      _
    $region7: #{tpu_custom_call.1} parent=1 // pred_check_branch
      %22 = sbr.rel (0) target = $region9
    $region8: #{tpu_custom_call.1} parent=1 // pred_region
      %24 = dma.done [#allocation3], 128
    $region9: #{tpu_custom_call.1} parent=1 // pred_fallthru
      _
    %v25 = vld [vmem:[#allocation2] sm:$0xff]
    %27 = vset.pattern.permute.xlu0 0
    %28 = vperm.xlu0 %27, %v25
    %v29 = vpop.permute.xlu0 %28
    %31 = vset.pattern.permute.xlu0 15
    %32 = vperm.xlu0 %31, %v25
    %v33 = vpop.permute.xlu0 %32
    %35 = vrot.lane.b32.xlu0 %v25, 2
    %v36 = vpop.permute.xlu0 %35
    %vm38 = vcmask 15360
    %v39 = vsel %vm38, %v29, %v36
    %vm40 = vcmask 146432
    %v41 = vsel %vm40, %v39, %v33
    %43 = vrot.lane.b32.xlu0 %v41, 127
    %v44 = vpop.permute.xlu0 %43
    %v46 = vadd.f32 %v41, %v44
    %47 = vrot.lane.b32.xlu0 %v41, 126
    %v48 = vpop.permute.xlu0 %47
    %v50 = vadd.f32 %v46, %v48
    %51 = vrot.lane.b32.xlu0 %v41, 125
    %v52 = vpop.permute.xlu0 %51
    %v54 = vadd.f32 %v50, %v52
    %55 = vrot.lane.b32.xlu0 %v41, 124
    %v56 = vpop.permute.xlu0 %55
    %v58 = vadd.f32 %v54, %v56
    %v59 = vmul.f32 %v58, 0.2
    %vm60 = vcmask 130048
    %61 = vst.msk [vmem:[#allocation5] sm:$0xff] %vm60, %v59
    // Predicated region
    $region10: #{tpu_custom_call.1} parent=1 // pred_check
      _
    $region11: #{tpu_custom_call.1} parent=1 // pred_check_branch
      %63 = sbr.rel (0) target = $region13
    $region12: #{tpu_custom_call.1} parent=1 // pred_region
      %65 = vsyncadd [#allocation4], 64
      %s66 = sshll.u32 [#allocation5], 4
      %s67 = int_to_ptr.vmem [resolvable:$true] %s66
      %s68 = sshll.u32 %s1, 4
      %s69 = int_to_ptr.hbm [resolvable:$true] %s68
      %74 = dma.vmem_to_hbm [thread:$0]  %s67, 64, %s69, [#allocation4], 64, 64, 4
    $region13: #{tpu_custom_call.1} parent=1 // pred_fallthru
      _
    // Predicated region
    $region14: #{tpu_custom_call.1} parent=1 // pred_check
      _
    $region15: #{tpu_custom_call.1} parent=1 // pred_check_branch
      %76 = sbr.rel (0) target = $region17
    $region16: #{tpu_custom_call.1} parent=1 // pred_region
      %78 = dma.done [#allocation4], 128
    $region17: #{tpu_custom_call.1} parent=1 // pred_fallthru
      _
    %79 = vsyncpa [#allocation3], 1
    %80 = vsyncpa [#allocation4], 1

</llo_original>
